<compile_context>
chip_gen: v5e
topology: v5e:2x2
jax: 0.10.0
libtpu: 0.0.40
codegen_flags: <defaults>
</compile_context>

<pallas_src>
import functools

import jax
import jax.numpy as jnp
from jax.experimental import pallas as pl
from jax.experimental.pallas import tpu as pltpu


def _round_up(x, m):
    return (x + m - 1) // m * m


def pack_conv_params(weight, bias):
    """One-time packing of Conv1d params into an MXU-ready augmented matrix.

    Returns w_aug of shape (round_up(C_out, 8), round_up(C_in*K + 1, 128)) f32 with
      w_aug[o, k*C_in + c] = weight[o, c, k]        (matches in-kernel im2col layout)
      w_aug[o, C_in*K]     = bias[o]                (pairs with the in-kernel ones row)
    Static across calls: compute it once at model init, not per inference.
    """
    C_out, C_in, K = weight.shape
    CK = C_in * K
    C_out_pad = _round_up(C_out, 8)
    CK_pad = _round_up(CK + 1, 128)          # +1 reserves the bias column
    w_flat = jnp.transpose(weight, (0, 2, 1)).reshape(C_out, CK).astype(jnp.float32)
    w_aug = jnp.concatenate([w_flat, bias.astype(jnp.float32)[:, None]], axis=1)
    w_aug = jnp.pad(w_aug, ((0, C_out_pad - C_out), (0, CK_pad - (CK + 1))))
    return w_aug


def _make_conv_kernel(C_in, K, CK, L_out):
    def kernel(x_ref, w_ref, o_ref, xcol_ref):
        # x_ref:    (C_in, L)            f32  one batch element
        # w_ref:    (C_out_pad, CK_pad)  f32  packed weights (+ bias column CK)
        # o_ref:    (C_out_pad, 128)     f32  lane-dense output tile
        # xcol_ref: (CK_pad, 128)        f32  in-kernel im2col scratch

        # Zero-init the scratch so slack rows/lanes never feed garbage (NaN*0)
        # into the GEMM, then set the bias-partner row to 1.0.
        xcol_ref[...] = jnp.zeros_like(xcol_ref)
        xcol_ref[pl.ds(CK, 1), :] = jnp.ones((1, xcol_ref.shape[1]),
                                             dtype=xcol_ref.dtype)

        # In-kernel im2col: row k*C_in + c, lane j  <-  x[c, j + k]  for j < L_out.
        # Static offset loads + masked stores; all cheap, every VLIW slot is idle.
        for k in range(K):
            xcol_ref[pl.ds(k * C_in, C_in), pl.ds(0, L_out)] = (
                x_ref[:, pl.ds(k, L_out)])

        # Single f32 MXU GEMM; bias arrives for free via the ones row.
        o_ref[...] = jnp.dot(w_ref[...], xcol_ref[...],
                             preferred_element_type=jnp.float32
                             ).astype(o_ref.dtype)

    return kernel


@functools.partial(jax.jit, static_argnames=("c_out", "kernel_size"))
def conv1d_forward(x, w_aug, *, c_out, kernel_size):
    """Conv1d forward. x: (N, C_in, L) -> (N, c_out, L - kernel_size + 1)."""
    N, C_in, L = x.shape
    K = kernel_size
    L_out = L - K + 1
    CK = C_in * K
    C_out_pad, CK_pad = w_aug.shape
    assert CK_pad >= CK + 1 and CK_pad % 128 == 0, (CK, CK_pad)

    # Lane-dense output width; single lane tile at this problem size.
    # TODO(synk): if N*L_out ever grows past one tile, tile the lane axis
    # (256-wide tiles on v6e/v7x) instead of widening this block.
    out_lanes = _round_up(L_out, 128)

    x = x.astype(jnp.float32)
    kernel = _make_conv_kernel(C_in, K, CK, L_out)

    out_pad = pl.pallas_call(
        kernel,
        out_shape=jax.ShapeDtypeStruct((N, C_out_pad, out_lanes), jnp.float32),
        grid=(N,),
        in_specs=[
            pl.BlockSpec((None, C_in, L), lambda n: (n, 0, 0)),      # x, per batch
            pl.BlockSpec((C_out_pad, CK_pad), lambda n: (0, 0)),     # weights, resident
        ],
        out_specs=pl.BlockSpec((None, C_out_pad, out_lanes), lambda n: (n, 0, 0)),
        scratch_shapes=[pltpu.VMEM((CK_pad, out_lanes), jnp.float32)],
        compiler_params=pltpu.CompilerParams(
            dimension_semantics=("parallel",)),
    )(x, w_aug)

    # Un-pad; layout is already PyTorch's (N, C_out, L_out).
    return out_pad[:, :c_out, :L_out].astype(x.dtype)


def _reference_conv1d(x, weight, bias):
    # f32 reference via XLA conv (NCW / OIW) for a correctness check.
    y = jax.lax.conv_general_dilated(
        x, weight, window_strides=(1,), padding="VALID",
        dimension_numbers=("NCH", "OIH", "NCH"))
    return y + bias[None, :, None]


if __name__ == "__main__":
    # Module params (synthetic, deterministic init — no checkpoint loading).
    in_channels = 4
    out_channels = 30
    kernel_size = 30

    # Small input consistent with Conv1d(in_channels, 30, 30): length >= 30.
    N, L = 2, 64

    key = jax.random.PRNGKey(0)
    kx, kw, kb = jax.random.split(key, 3)

    x = jax.random.normal(kx, (N, in_channels, L), dtype=jnp.float32)

    # PyTorch-style uniform(-1/sqrt(fan_in), 1/sqrt(fan_in)) init, deterministic.
    fan_in = in_channels * kernel_size
    bound = 1.0 / (fan_in ** 0.5)
    weight = jax.random.uniform(kw, (out_channels, in_channels, kernel_size),
                                dtype=jnp.float32, minval=-bound, maxval=bound)
    bias = jax.random.uniform(kb, (out_channels,), dtype=jnp.float32,
                              minval=-bound, maxval=bound)

    # One-time "model init": pack + pad weights and fold in the bias.
    w_aug = jax.block_until_ready(pack_conv_params(weight, bias))

    out = conv1d_forward(x, w_aug, c_out=out_channels, kernel_size=kernel_size)
    out = jax.block_until_ready(out)

    ref = jax.block_until_ready(_reference_conv1d(x, weight, bias))
    assert out.shape == (N, out_channels, L - kernel_size + 1), out.shape
    assert jnp.allclose(out, ref, atol=2e-2, rtol=2e-2), float(
        jnp.max(jnp.abs(out - ref)))

    print("KERNEL_OK")
</pallas_src>

<mosaic_0001>
module attributes {stable_mosaic.version = 11 : i64} {
  func.func @kernel(%arg0: i32, %arg1: memref<1x4x64xf32, #tpu.memory_space<vmem>>, %arg2: memref<32x128xf32, #tpu.memory_space<vmem>>, %arg3: memref<1x32x128xf32, #tpu.memory_space<vmem>>, %arg4: memref<128x128xf32, #tpu.memory_space<vmem>>) attributes {dimension_semantics = [#tpu.dimension_semantics<parallel>], iteration_bounds = array<i64: 2>, scalar_prefetch = 0 : i64, scratch_operands = 1 : i64, tpu.core_type = #tpu.core_type<tc>, window_params = [{transform_indices = @transform_0, window_bounds = array<i64: 1, 4, 64>}, {pipeline_mode = #tpu.pipeline_mode<synchronous>, transform_indices = @transform_1, window_bounds = array<i64: 32, 128>}, {transform_indices = @transform_2, window_bounds = array<i64: 1, 32, 128>}]} {
    %cst = arith.constant 0.000000e+00 : f32
    %0 = vector.broadcast %cst : f32 to vector<128x128xf32>
    %c0 = arith.constant 0 : index
    %c0_0 = arith.constant 0 : index
    %1 = vector.load %arg4[%c0, %c0_0] : memref<128x128xf32, #tpu.memory_space<vmem>>, vector<128x128xf32>
    tpu.vector_store %arg4[%c0, %c0_0], %0 {strides = array<i32>} : memref<128x128xf32, #tpu.memory_space<vmem>>, vector<128x128xf32>,
    %cst_1 = arith.constant 1.000000e+00 : f32
    %2 = vector.broadcast %cst_1 : f32 to vector<1x128xf32>
    %c120 = arith.constant 120 : index
    %c0_2 = arith.constant 0 : index
    %3 = vector.load %arg4[%c120, %c0_2] : memref<128x128xf32, #tpu.memory_space<vmem>>, vector<1x128xf32>
    tpu.vector_store %arg4[%c120, %c0_2], %2 {strides = array<i32>} : memref<128x128xf32, #tpu.memory_space<vmem>>, vector<1x128xf32>,
    %c0_3 = arith.constant 0 : index
    %c0_4 = arith.constant 0 : index
    %c0_5 = arith.constant 0 : index
    %4 = vector.load %arg1[%c0_3, %c0_4, %c0_5] : memref<1x4x64xf32, #tpu.memory_space<vmem>>, vector<1x4x35xf32>
    %5 = vector.shape_cast %4 : vector<1x4x35xf32> to vector<4x35xf32>
    %c0_6 = arith.constant 0 : index
    %c0_7 = arith.constant 0 : index
    %6 = vector.load %arg4[%c0_6, %c0_7] : memref<128x128xf32, #tpu.memory_space<vmem>>, vector<4x35xf32>
    tpu.vector_store %arg4[%c0_6, %c0_7], %5 {strides = array<i32>} : memref<128x128xf32, #tpu.memory_space<vmem>>, vector<4x35xf32>,
    %c0_8 = arith.constant 0 : index
    %c0_9 = arith.constant 0 : index
    %c1 = arith.constant 1 : index
    %7 = vector.load %arg1[%c0_8, %c0_9, %c1] : memref<1x4x64xf32, #tpu.memory_space<vmem>>, vector<1x4x35xf32>
    %8 = vector.shape_cast %7 : vector<1x4x35xf32> to vector<4x35xf32>
    %c4 = arith.constant 4 : index
    %c0_10 = arith.constant 0 : index
    %9 = vector.load %arg4[%c4, %c0_10] : memref<128x128xf32, #tpu.memory_space<vmem>>, vector<4x35xf32>
    tpu.vector_store %arg4[%c4, %c0_10], %8 {strides = array<i32>} : memref<128x128xf32, #tpu.memory_space<vmem>>, vector<4x35xf32>,
    %c0_11 = arith.constant 0 : index
    %c0_12 = arith.constant 0 : index
    %c2 = arith.constant 2 : index
    %10 = vector.load %arg1[%c0_11, %c0_12, %c2] : memref<1x4x64xf32, #tpu.memory_space<vmem>>, vector<1x4x35xf32>
    %11 = vector.shape_cast %10 : vector<1x4x35xf32> to vector<4x35xf32>
    %c8 = arith.constant 8 : index
    %c0_13 = arith.constant 0 : index
    %12 = vector.load %arg4[%c8, %c0_13] : memref<128x128xf32, #tpu.memory_space<vmem>>, vector<4x35xf32>
    tpu.vector_store %arg4[%c8, %c0_13], %11 {strides = array<i32>} : memref<128x128xf32, #tpu.memory_space<vmem>>, vector<4x35xf32>,
    %c0_14 = arith.constant 0 : index
    %c0_15 = arith.constant 0 : index
    %c3 = arith.constant 3 : index
    %13 = vector.load %arg1[%c0_14, %c0_15, %c3] : memref<1x4x64xf32, #tpu.memory_space<vmem>>, vector<1x4x35xf32>
    %14 = vector.shape_cast %13 : vector<1x4x35xf32> to vector<4x35xf32>
    %c12 = arith.constant 12 : index
    %c0_16 = arith.constant 0 : index
    %15 = vector.load %arg4[%c12, %c0_16] : memref<128x128xf32, #tpu.memory_space<vmem>>, vector<4x35xf32>
    tpu.vector_store %arg4[%c12, %c0_16], %14 {strides = array<i32>} : memref<128x128xf32, #tpu.memory_space<vmem>>, vector<4x35xf32>,
    %c0_17 = arith.constant 0 : index
    %c0_18 = arith.constant 0 : index
    %c4_19 = arith.constant 4 : index
    %16 = vector.load %arg1[%c0_17, %c0_18, %c4_19] : memref<1x4x64xf32, #tpu.memory_space<vmem>>, vector<1x4x35xf32>
    %17 = vector.shape_cast %16 : vector<1x4x35xf32> to vector<4x35xf32>
    %c16 = arith.constant 16 : index
    %c0_20 = arith.constant 0 : index
    %18 = vector.load %arg4[%c16, %c0_20] : memref<128x128xf32, #tpu.memory_space<vmem>>, vector<4x35xf32>
    tpu.vector_store %arg4[%c16, %c0_20], %17 {strides = array<i32>} : memref<128x128xf32, #tpu.memory_space<vmem>>, vector<4x35xf32>,
    %c0_21 = arith.constant 0 : index
    %c0_22 = arith.constant 0 : index
    %c5 = arith.constant 5 : index
    %19 = vector.load %arg1[%c0_21, %c0_22, %c5] : memref<1x4x64xf32, #tpu.memory_space<vmem>>, vector<1x4x35xf32>
    %20 = vector.shape_cast %19 : vector<1x4x35xf32> to vector<4x35xf32>
    %c20 = arith.constant 20 : index
    %c0_23 = arith.constant 0 : index
    %21 = vector.load %arg4[%c20, %c0_23] : memref<128x128xf32, #tpu.memory_space<vmem>>, vector<4x35xf32>
    tpu.vector_store %arg4[%c20, %c0_23], %20 {strides = array<i32>} : memref<128x128xf32, #tpu.memory_space<vmem>>, vector<4x35xf32>,
    %c0_24 = arith.constant 0 : index
    %c0_25 = arith.constant 0 : index
    %c6 = arith.constant 6 : index
    %22 = vector.load %arg1[%c0_24, %c0_25, %c6] : memref<1x4x64xf32, #tpu.memory_space<vmem>>, vector<1x4x35xf32>
    %23 = vector.shape_cast %22 : vector<1x4x35xf32> to vector<4x35xf32>
    %c24 = arith.constant 24 : index
    %c0_26 = arith.constant 0 : index
    %24 = vector.load %arg4[%c24, %c0_26] : memref<128x128xf32, #tpu.memory_space<vmem>>, vector<4x35xf32>
    tpu.vector_store %arg4[%c24, %c0_26], %23 {strides = array<i32>} : memref<128x128xf32, #tpu.memory_space<vmem>>, vector<4x35xf32>,
    %c0_27 = arith.constant 0 : index
    %c0_28 = arith.constant 0 : index
    %c7 = arith.constant 7 : index
    %25 = vector.load %arg1[%c0_27, %c0_28, %c7] : memref<1x4x64xf32, #tpu.memory_space<vmem>>, vector<1x4x35xf32>
    %26 = vector.shape_cast %25 : vector<1x4x35xf32> to vector<4x35xf32>
    %c28 = arith.constant 28 : index
    %c0_29 = arith.constant 0 : index
    %27 = vector.load %arg4[%c28, %c0_29] : memref<128x128xf32, #tpu.memory_space<vmem>>, vector<4x35xf32>
    tpu.vector_store %arg4[%c28, %c0_29], %26 {strides = array<i32>} : memref<128x128xf32, #tpu.memory_space<vmem>>, vector<4x35xf32>,
    %c0_30 = arith.constant 0 : index
    %c0_31 = arith.constant 0 : index
    %c8_32 = arith.constant 8 : index
    %28 = vector.load %arg1[%c0_30, %c0_31, %c8_32] : memref<1x4x64xf32, #tpu.memory_space<vmem>>, vector<1x4x35xf32>
    %29 = vector.shape_cast %28 : vector<1x4x35xf32> to vector<4x35xf32>
    %c32 = arith.constant 32 : index
    %c0_33 = arith.constant 0 : index
    %30 = vector.load %arg4[%c32, %c0_33] : memref<128x128xf32, #tpu.memory_space<vmem>>, vector<4x35xf32>
    tpu.vector_store %arg4[%c32, %c0_33], %29 {strides = array<i32>} : memref<128x128xf32, #tpu.memory_space<vmem>>, vector<4x35xf32>,
    %c0_34 = arith.constant 0 : index
    %c0_35 = arith.constant 0 : index
    %c9 = arith.constant 9 : index
    %31 = vector.load %arg1[%c0_34, %c0_35, %c9] : memref<1x4x64xf32, #tpu.memory_space<vmem>>, vector<1x4x35xf32>
    %32 = vector.shape_cast %31 : vector<1x4x35xf32> to vector<4x35xf32>
    %c36 = arith.constant 36 : index
    %c0_36 = arith.constant 0 : index
    %33 = vector.load %arg4[%c36, %c0_36] : memref<128x128xf32, #tpu.memory_space<vmem>>, vector<4x35xf32>
    tpu.vector_store %arg4[%c36, %c0_36], %32 {strides = array<i32>} : memref<128x128xf32, #tpu.memory_space<vmem>>, vector<4x35xf32>,
    %c0_37 = arith.constant 0 : index
    %c0_38 = arith.constant 0 : index
    %c10 = arith.constant 10 : index
    %34 = vector.load %arg1[%c0_37, %c0_38, %c10] : memref<1x4x64xf32, #tpu.memory_space<vmem>>, vector<1x4x35xf32>
    %35 = vector.shape_cast %34 : vector<1x4x35xf32> to vector<4x35xf32>
    %c40 = arith.constant 40 : index
    %c0_39 = arith.constant 0 : index
    %36 = vector.load %arg4[%c40, %c0_39] : memref<128x128xf32, #tpu.memory_space<vmem>>, vector<4x35xf32>
    tpu.vector_store %arg4[%c40, %c0_39], %35 {strides = array<i32>} : memref<128x128xf32, #tpu.memory_space<vmem>>, vector<4x35xf32>,
    %c0_40 = arith.constant 0 : index
    %c0_41 = arith.constant 0 : index
    %c11 = arith.constant 11 : index
    %37 = vector.load %arg1[%c0_40, %c0_41, %c11] : memref<1x4x64xf32, #tpu.memory_space<vmem>>, vector<1x4x35xf32>
    %38 = vector.shape_cast %37 : vector<1x4x35xf32> to vector<4x35xf32>
    %c44 = arith.constant 44 : index
    %c0_42 = arith.constant 0 : index
    %39 = vector.load %arg4[%c44, %c0_42] : memref<128x128xf32, #tpu.memory_space<vmem>>, vector<4x35xf32>
    tpu.vector_store %arg4[%c44, %c0_42], %38 {strides = array<i32>} : memref<128x128xf32, #tpu.memory_space<vmem>>, vector<4x35xf32>,
    %c0_43 = arith.constant 0 : index
    %c0_44 = arith.constant 0 : index
    %c12_45 = arith.constant 12 : index
    %40 = vector.load %arg1[%c0_43, %c0_44, %c12_45] : memref<1x4x64xf32, #tpu.memory_space<vmem>>, vector<1x4x35xf32>
    %41 = vector.shape_cast %40 : vector<1x4x35xf32> to vector<4x35xf32>
    %c48 = arith.constant 48 : index
    %c0_46 = arith.constant 0 : index
    %42 = vector.load %arg4[%c48, %c0_46] : memref<128x128xf32, #tpu.memory_space<vmem>>, vector<4x35xf32>
    tpu.vector_store %arg4[%c48, %c0_46], %41 {strides = array<i32>} : memref<128x128xf32, #tpu.memory_space<vmem>>, vector<4x35xf32>,
    %c0_47 = arith.constant 0 : index
    %c0_48 = arith.constant 0 : index
    %c13 = arith.constant 13 : index
    %43 = vector.load %arg1[%c0_47, %c0_48, %c13] : memref<1x4x64xf32, #tpu.memory_space<vmem>>, vector<1x4x35xf32>
    %44 = vector.shape_cast %43 : vector<1x4x35xf32> to vector<4x35xf32>
    %c52 = arith.constant 52 : index
    %c0_49 = arith.constant 0 : index
    %45 = vector.load %arg4[%c52, %c0_49] : memref<128x128xf32, #tpu.memory_space<vmem>>, vector<4x35xf32>
    tpu.vector_store %arg4[%c52, %c0_49], %44 {strides = array<i32>} : memref<128x128xf32, #tpu.memory_space<vmem>>, vector<4x35xf32>,
    %c0_50 = arith.constant 0 : index
    %c0_51 = arith.constant 0 : index
    %c14 = arith.constant 14 : index
    %46 = vector.load %arg1[%c0_50, %c0_51, %c14] : memref<1x4x64xf32, #tpu.memory_space<vmem>>, vector<1x4x35xf32>
    %47 = vector.shape_cast %46 : vector<1x4x35xf32> to vector<4x35xf32>
    %c56 = arith.constant 56 : index
    %c0_52 = arith.constant 0 : index
    %48 = vector.load %arg4[%c56, %c0_52] : memref<128x128xf32, #tpu.memory_space<vmem>>, vector<4x35xf32>
    tpu.vector_store %arg4[%c56, %c0_52], %47 {strides = array<i32>} : memref<128x128xf32, #tpu.memory_space<vmem>>, vector<4x35xf32>,
    %c0_53 = arith.constant 0 : index
    %c0_54 = arith.constant 0 : index
    %c15 = arith.constant 15 : index
    %49 = vector.load %arg1[%c0_53, %c0_54, %c15] : memref<1x4x64xf32, #tpu.memory_space<vmem>>, vector<1x4x35xf32>
    %50 = vector.shape_cast %49 : vector<1x4x35xf32> to vector<4x35xf32>
    %c60 = arith.constant 60 : index
    %c0_55 = arith.constant 0 : index
    %51 = vector.load %arg4[%c60, %c0_55] : memref<128x128xf32, #tpu.memory_space<vmem>>, vector<4x35xf32>
    tpu.vector_store %arg4[%c60, %c0_55], %50 {strides = array<i32>} : memref<128x128xf32, #tpu.memory_space<vmem>>, vector<4x35xf32>,
    %c0_56 = arith.constant 0 : index
    %c0_57 = arith.constant 0 : index
    %c16_58 = arith.constant 16 : index
    %52 = vector.load %arg1[%c0_56, %c0_57, %c16_58] : memref<1x4x64xf32, #tpu.memory_space<vmem>>, vector<1x4x35xf32>
    %53 = vector.shape_cast %52 : vector<1x4x35xf32> to vector<4x35xf32>
    %c64 = arith.constant 64 : index
    %c0_59 = arith.constant 0 : index
    %54 = vector.load %arg4[%c64, %c0_59] : memref<128x128xf32, #tpu.memory_space<vmem>>, vector<4x35xf32>
    tpu.vector_store %arg4[%c64, %c0_59], %53 {strides = array<i32>} : memref<128x128xf32, #tpu.memory_space<vmem>>, vector<4x35xf32>,
    %c0_60 = arith.constant 0 : index
    %c0_61 = arith.constant 0 : index
    %c17 = arith.constant 17 : index
    %55 = vector.load %arg1[%c0_60, %c0_61, %c17] : memref<1x4x64xf32, #tpu.memory_space<vmem>>, vector<1x4x35xf32>
    %56 = vector.shape_cast %55 : vector<1x4x35xf32> to vector<4x35xf32>
    %c68 = arith.constant 68 : index
    %c0_62 = arith.constant 0 : index
    %57 = vector.load %arg4[%c68, %c0_62] : memref<128x128xf32, #tpu.memory_space<vmem>>, vector<4x35xf32>
    tpu.vector_store %arg4[%c68, %c0_62], %56 {strides = array<i32>} : memref<128x128xf32, #tpu.memory_space<vmem>>, vector<4x35xf32>,
    %c0_63 = arith.constant 0 : index
    %c0_64 = arith.constant 0 : index
    %c18 = arith.constant 18 : index
    %58 = vector.load %arg1[%c0_63, %c0_64, %c18] : memref<1x4x64xf32, #tpu.memory_space<vmem>>, vector<1x4x35xf32>
    %59 = vector.shape_cast %58 : vector<1x4x35xf32> to vector<4x35xf32>
    %c72 = arith.constant 72 : index
    %c0_65 = arith.constant 0 : index
    %60 = vector.load %arg4[%c72, %c0_65] : memref<128x128xf32, #tpu.memory_space<vmem>>, vector<4x35xf32>
    tpu.vector_store %arg4[%c72, %c0_65], %59 {strides = array<i32>} : memref<128x128xf32, #tpu.memory_space<vmem>>, vector<4x35xf32>,
    %c0_66 = arith.constant 0 : index
    %c0_67 = arith.constant 0 : index
    %c19 = arith.constant 19 : index
    %61 = vector.load %arg1[%c0_66, %c0_67, %c19] : memref<1x4x64xf32, #tpu.memory_space<vmem>>, vector<1x4x35xf32>
    %62 = vector.shape_cast %61 : vector<1x4x35xf32> to vector<4x35xf32>
    %c76 = arith.constant 76 : index
    %c0_68 = arith.constant 0 : index
    %63 = vector.load %arg4[%c76, %c0_68] : memref<128x128xf32, #tpu.memory_space<vmem>>, vector<4x35xf32>
    tpu.vector_store %arg4[%c76, %c0_68], %62 {strides = array<i32>} : memref<128x128xf32, #tpu.memory_space<vmem>>, vector<4x35xf32>,
    %c0_69 = arith.constant 0 : index
    %c0_70 = arith.constant 0 : index
    %c20_71 = arith.constant 20 : index
    %64 = vector.load %arg1[%c0_69, %c0_70, %c20_71] : memref<1x4x64xf32, #tpu.memory_space<vmem>>, vector<1x4x35xf32>
    %65 = vector.shape_cast %64 : vector<1x4x35xf32> to vector<4x35xf32>
    %c80 = arith.constant 80 : index
    %c0_72 = arith.constant 0 : index
    %66 = vector.load %arg4[%c80, %c0_72] : memref<128x128xf32, #tpu.memory_space<vmem>>, vector<4x35xf32>
    tpu.vector_store %arg4[%c80, %c0_72], %65 {strides = array<i32>} : memref<128x128xf32, #tpu.memory_space<vmem>>, vector<4x35xf32>,
    %c0_73 = arith.constant 0 : index
    %c0_74 = arith.constant 0 : index
    %c21 = arith.constant 21 : index
    %67 = vector.load %arg1[%c0_73, %c0_74, %c21] : memref<1x4x64xf32, #tpu.memory_space<vmem>>, vector<1x4x35xf32>
    %68 = vector.shape_cast %67 : vector<1x4x35xf32> to vector<4x35xf32>
    %c84 = arith.constant 84 : index
    %c0_75 = arith.constant 0 : index
    %69 = vector.load %arg4[%c84, %c0_75] : memref<128x128xf32, #tpu.memory_space<vmem>>, vector<4x35xf32>
    tpu.vector_store %arg4[%c84, %c0_75], %68 {strides = array<i32>} : memref<128x128xf32, #tpu.memory_space<vmem>>, vector<4x35xf32>,
    %c0_76 = arith.constant 0 : index
    %c0_77 = arith.constant 0 : index
    %c22 = arith.constant 22 : index
    %70 = vector.load %arg1[%c0_76, %c0_77, %c22] : memref<1x4x64xf32, #tpu.memory_space<vmem>>, vector<1x4x35xf32>
    %71 = vector.shape_cast %70 : vector<1x4x35xf32> to vector<4x35xf32>
    %c88 = arith.constant 88 : index
    %c0_78 = arith.constant 0 : index
    %72 = vector.load %arg4[%c88, %c0_78] : memref<128x128xf32, #tpu.memory_space<vmem>>, vector<4x35xf32>
    tpu.vector_store %arg4[%c88, %c0_78], %71 {strides = array<i32>} : memref<128x128xf32, #tpu.memory_space<vmem>>, vector<4x35xf32>,
    %c0_79 = arith.constant 0 : index
    %c0_80 = arith.constant 0 : index
    %c23 = arith.constant 23 : index
    %73 = vector.load %arg1[%c0_79, %c0_80, %c23] : memref<1x4x64xf32, #tpu.memory_space<vmem>>, vector<1x4x35xf32>
    %74 = vector.shape_cast %73 : vector<1x4x35xf32> to vector<4x35xf32>
    %c92 = arith.constant 92 : index
    %c0_81 = arith.constant 0 : index
    %75 = vector.load %arg4[%c92, %c0_81] : memref<128x128xf32, #tpu.memory_space<vmem>>, vector<4x35xf32>
    tpu.vector_store %arg4[%c92, %c0_81], %74 {strides = array<i32>} : memref<128x128xf32, #tpu.memory_space<vmem>>, vector<4x35xf32>,
    %c0_82 = arith.constant 0 : index
    %c0_83 = arith.constant 0 : index
    %c24_84 = arith.constant 24 : index
    %76 = vector.load %arg1[%c0_82, %c0_83, %c24_84] : memref<1x4x64xf32, #tpu.memory_space<vmem>>, vector<1x4x35xf32>
    %77 = vector.shape_cast %76 : vector<1x4x35xf32> to vector<4x35xf32>
    %c96 = arith.constant 96 : index
    %c0_85 = arith.constant 0 : index
    %78 = vector.load %arg4[%c96, %c0_85] : memref<128x128xf32, #tpu.memory_space<vmem>>, vector<4x35xf32>
    tpu.vector_store %arg4[%c96, %c0_85], %77 {strides = array<i32>} : memref<128x128xf32, #tpu.memory_space<vmem>>, vector<4x35xf32>,
    %c0_86 = arith.constant 0 : index
    %c0_87 = arith.constant 0 : index
    %c25 = arith.constant 25 : index
    %79 = vector.load %arg1[%c0_86, %c0_87, %c25] : memref<1x4x64xf32, #tpu.memory_space<vmem>>, vector<1x4x35xf32>
    %80 = vector.shape_cast %79 : vector<1x4x35xf32> to vector<4x35xf32>
    %c100 = arith.constant 100 : index
    %c0_88 = arith.constant 0 : index
    %81 = vector.load %arg4[%c100, %c0_88] : memref<128x128xf32, #tpu.memory_space<vmem>>, vector<4x35xf32>
    tpu.vector_store %arg4[%c100, %c0_88], %80 {strides = array<i32>} : memref<128x128xf32, #tpu.memory_space<vmem>>, vector<4x35xf32>,
    %c0_89 = arith.constant 0 : index
    %c0_90 = arith.constant 0 : index
    %c26 = arith.constant 26 : index
    %82 = vector.load %arg1[%c0_89, %c0_90, %c26] : memref<1x4x64xf32, #tpu.memory_space<vmem>>, vector<1x4x35xf32>
    %83 = vector.shape_cast %82 : vector<1x4x35xf32> to vector<4x35xf32>
    %c104 = arith.constant 104 : index
    %c0_91 = arith.constant 0 : index
    %84 = vector.load %arg4[%c104, %c0_91] : memref<128x128xf32, #tpu.memory_space<vmem>>, vector<4x35xf32>
    tpu.vector_store %arg4[%c104, %c0_91], %83 {strides = array<i32>} : memref<128x128xf32, #tpu.memory_space<vmem>>, vector<4x35xf32>,
    %c0_92 = arith.constant 0 : index
    %c0_93 = arith.constant 0 : index
    %c27 = arith.constant 27 : index
    %85 = vector.load %arg1[%c0_92, %c0_93, %c27] : memref<1x4x64xf32, #tpu.memory_space<vmem>>, vector<1x4x35xf32>
    %86 = vector.shape_cast %85 : vector<1x4x35xf32> to vector<4x35xf32>
    %c108 = arith.constant 108 : index
    %c0_94 = arith.constant 0 : index
    %87 = vector.load %arg4[%c108, %c0_94] : memref<128x128xf32, #tpu.memory_space<vmem>>, vector<4x35xf32>
    tpu.vector_store %arg4[%c108, %c0_94], %86 {strides = array<i32>} : memref<128x128xf32, #tpu.memory_space<vmem>>, vector<4x35xf32>,
    %c0_95 = arith.constant 0 : index
    %c0_96 = arith.constant 0 : index
    %c28_97 = arith.constant 28 : index
    %88 = vector.load %arg1[%c0_95, %c0_96, %c28_97] : memref<1x4x64xf32, #tpu.memory_space<vmem>>, vector<1x4x35xf32>
    %89 = vector.shape_cast %88 : vector<1x4x35xf32> to vector<4x35xf32>
    %c112 = arith.constant 112 : index
    %c0_98 = arith.constant 0 : index
    %90 = vector.load %arg4[%c112, %c0_98] : memref<128x128xf32, #tpu.memory_space<vmem>>, vector<4x35xf32>
    tpu.vector_store %arg4[%c112, %c0_98], %89 {strides = array<i32>} : memref<128x128xf32, #tpu.memory_space<vmem>>, vector<4x35xf32>,
    %c0_99 = arith.constant 0 : index
    %c0_100 = arith.constant 0 : index
    %c29 = arith.constant 29 : index
    %91 = vector.load %arg1[%c0_99, %c0_100, %c29] : memref<1x4x64xf32, #tpu.memory_space<vmem>>, vector<1x4x35xf32>
    %92 = vector.shape_cast %91 : vector<1x4x35xf32> to vector<4x35xf32>
    %c116 = arith.constant 116 : index
    %c0_101 = arith.constant 0 : index
    %93 = vector.load %arg4[%c116, %c0_101] : memref<128x128xf32, #tpu.memory_space<vmem>>, vector<4x35xf32>
    tpu.vector_store %arg4[%c116, %c0_101], %92 {strides = array<i32>} : memref<128x128xf32, #tpu.memory_space<vmem>>, vector<4x35xf32>,
    %c0_102 = arith.constant 0 : index
    %c0_103 = arith.constant 0 : index
    %94 = vector.load %arg2[%c0_102, %c0_103] : memref<32x128xf32, #tpu.memory_space<vmem>>, vector<32x128xf32>
    %c0_104 = arith.constant 0 : index
    %c0_105 = arith.constant 0 : index
    %95 = vector.load %arg4[%c0_104, %c0_105] : memref<128x128xf32, #tpu.memory_space<vmem>>, vector<128x128xf32>
    %cst_106 = arith.constant dense<0.000000e+00> : vector<32x128xf32>
    %96 = tpu.matmul %94, %95, %cst_106 {dimension_numbers = #tpu.dot_dimension_numbers<[1], [0], [0], [1], [0, 0, 1, 1], [], []>} : vector<32x128xf32>, vector<128x128xf32>, vector<32x128xf32> -> vector<32x128xf32>
    %c0_107 = arith.constant 0 : index
    %c0_108 = arith.constant 0 : index
    %c0_109 = arith.constant 0 : index
    %97 = vector.load %arg3[%c0_107, %c0_108, %c0_109] : memref<1x32x128xf32, #tpu.memory_space<vmem>>, vector<1x32x128xf32>
    %98 = vector.shape_cast %97 : vector<1x32x128xf32> to vector<32x128xf32>
    %99 = vector.shape_cast %96 : vector<32x128xf32> to vector<1x32x128xf32>
    tpu.vector_store %arg3[%c0_107, %c0_108, %c0_109], %99 {strides = array<i32>} : memref<1x32x128xf32, #tpu.memory_space<vmem>>, vector<1x32x128xf32>,
    return
  }
  func.func @transform_0(%arg0: i32) -> (i32, i32, i32) {
    %c0_i32 = arith.constant 0 : i32
    %c0_i32_0 = arith.constant 0 : i32
    %c0_i32_1 = arith.constant 0 : i32
    return %arg0, %c0_i32, %c0_i32_0 : i32, i32, i32
  }
  func.func @transform_1(%arg0: i32) -> (i32, i32) {
    %c0_i32 = arith.constant 0 : i32
    %c0_i32_0 = arith.constant 0 : i32
    %c0_i32_1 = arith.constant 0 : i32
    return %c0_i32, %c0_i32_0 : i32, i32
  }
  func.func @transform_2(%arg0: i32) -> (i32, i32, i32) {
    %c0_i32 = arith.constant 0 : i32
    %c0_i32_0 = arith.constant 0 : i32
    %c0_i32_1 = arith.constant 0 : i32
    return %arg0, %c0_i32, %c0_i32_0 : i32, i32, i32
  }
}

</mosaic_0001>

<llo_original>
// kernel: conv1d_forward.1
$region0: #{conv1d_forward.1}
  #allocation0 [shape = 'u32[]', space=smem, size = 0x4, offset = 0x4, fixed_abs, tag = 'smem constant byte address 0x4 - core index']
  #allocation1 [shape = 'u32[72,128]{1,0:T(1,128)}', space=vmem, size = 0x9000, scoped, tag = 'internal scratch']
  #allocation2 [shape = 'f32[128,128]{1,0:T(8,128)}', space=vmem, size = 0x10000, scoped, tag = 'scratch operand']
  %s0 = inlined_call_operand.hbm [shape: f32[2,4,64], index: 0, kind: input, shape index: {}]
  %s1 = inlined_call_operand.hbm [shape: f32[32,128], index: 1, kind: input, shape index: {}]
  %s2 = inlined_call_operand.vmem [shape: f32[2,32,128], index: 2, kind: output, shape index: {}]
  %s3 = sld [smem:[#allocation0]]
  $region49: #{conv1d_forward.1} parent=0
    _
  %s5 = ssub.s32 1, %s3
  %s6 = scalar_select 0, %s5, %s3
  $region1: #{conv1d_forward.1} parent=0
    #allocation3 [shape = 'u8[4096]{0}', space=vmem, size = 0x1000, scoped, tag = 'input window, operand 0']
    #allocation4 [shape = 's32[2]{0}', space=sflag, size = 0x8, scoped, tag = 'scoped memory for conv1d_forward.1']
    #allocation5 [shape = 'u8[16384]{0}', space=vmem, size = 0x4000, scoped, tag = 'input window, operand 1, single buffered']
    #allocation6 [shape = 's32[1]{0}', space=sflag, size = 0x4, scoped, tag = 'scoped memory for conv1d_forward.1']
    %7 = vsyncpa [#allocation4], 0
    %s8 = scalar_lea.sflag [#allocation4], 1
    %9 = vsyncpa %s8, 0
    %10 = vsyncpa [#allocation6], 0
    loop: start=0, step=1, limit=4
    $region2: #{conv1d_forward.1} parent=1 // loop_pre_header
      _
    $region3: #{conv1d_forward.1} parent=1 // loop_header
      %s12 = sphi 0, %s16
      %p13 = scmp.ge.s32.totalorder %s12, 4
      %s22 = sphi 0, %s24
      %s25 = sphi 0, %s22
      %s26 = sphi 0, %s25
      %s42 = sphi 0, %s26
      %s46 = sphi 0, %s46
      %s48 = sphi 0, %s46
      %s49 = sphi 0, %s48
      %s63 = sphi 0, %s49
      %s69 = sphi 0, %s71
      %s72 = sphi 0, %s69
      %s73 = sphi 0, %s72
      %s89 = sphi 0, %s73
    $region4: #{conv1d_forward.1} parent=1 // loop_header_branch
      %15 = sbr.rel (%p13) target = $region8
    $region5: #{conv1d_forward.1} parent=1 // loop_body
      %s17 = ssub.s32 %s12, 1
      %s18 = ssub.s32 %s12, 2
      %s19 = sadd.s32 %s12, 1
      %s20 = ssub.s32 %s12, %s19
      %p21 = scmp.eq.s32.totalorder %s20, 0
      %s23 = sadd.s32 %s22, 1
      %s24 = scalar_select %p21, %s22, %s23
      %p27 = pneg %p21
      %p28 = scmp.eq.s32.totalorder %s12, 1
      %p29 = por %p27, %p28
      %p30 = scmp.ne.s32.totalorder %s22, %s25
      %p31 = scmp.eq.s32.totalorder %s12, 0
      %p32 = por %p30, %p31
      %p33 = scmp.ne.s32.totalorder %s22, %s25
      %p34 = scmp.eq.s32.totalorder %s17, 1
      %p35 = por %p33, %p34
      %p36 = scmp.ne.s32.totalorder %s25, %s26
      %p37 = scmp.eq.s32.totalorder %s17, 0
      %p38 = por %p36, %p37
      %p39 = scmp.ne.s32.totalorder %s25, %s26
      %p40 = scmp.eq.s32.totalorder %s18, 1
      %p41 = por %p39, %p40
      %p43 = scmp.ne.s32.totalorder %s26, %s42
      %p44 = scmp.eq.s32.totalorder %s18, 0
      %p45 = por %p43, %p44
      %s47 = sadd.s32 %s46, 1
      %p50 = scmp.eq.s32.totalorder %s12, 1
      %p51 = scmp.ne.s32.totalorder %s46, %s48
      %p52 = scmp.eq.s32.totalorder %s12, 0
      %p53 = por %p51, %p52
      %p54 = scmp.ne.s32.totalorder %s46, %s48
      %p55 = scmp.eq.s32.totalorder %s17, 1
      %p56 = por %p54, %p55
      %p57 = scmp.ne.s32.totalorder %s48, %s49
      %p58 = scmp.eq.s32.totalorder %s17, 0
      %p59 = por %p57, %p58
      %p60 = scmp.ne.s32.totalorder %s48, %s49
      %p61 = scmp.eq.s32.totalorder %s18, 1
      %p62 = por %p60, %p61
      %p64 = scmp.ne.s32.totalorder %s49, %s63
      %p65 = scmp.eq.s32.totalorder %s18, 0
      %p66 = por %p64, %p65
      %s67 = ssub.s32 %s12, %s19
      %p68 = scmp.eq.s32.totalorder %s67, 0
      %s70 = sadd.s32 %s69, 1
      %s71 = scalar_select %p68, %s69, %s70
      %p74 = pneg %p68
      %p75 = scmp.eq.s32.totalorder %s12, 1
      %p76 = por %p74, %p75
      %p77 = scmp.ne.s32.totalorder %s69, %s72
      %p78 = scmp.eq.s32.totalorder %s12, 0
      %p79 = por %p77, %p78
      %p80 = scmp.ne.s32.totalorder %s69, %s72
      %p81 = scmp.eq.s32.totalorder %s17, 1
      %p82 = por %p80, %p81
      %p83 = scmp.ne.s32.totalorder %s72, %s73
      %p84 = scmp.eq.s32.totalorder %s17, 0
      %p85 = por %p83, %p84
      %p86 = scmp.ne.s32.totalorder %s72, %s73
      %p87 = scmp.eq.s32.totalorder %s18, 1
      %p88 = por %p86, %p87
      %p90 = scmp.ne.s32.totalorder %s73, %s89
      %p91 = scmp.eq.s32.totalorder %s18, 0
      %p92 = por %p90, %p91
      %p93 = scmp.le.s32.totalorder 1, %s12
      %p94 = scmp.lt.s32.totalorder %s12, 3
      %p95 = pnand %p93, %p94
      %p96 = pneg %p95
      // Predicated region
      $region9: #{conv1d_forward.1} parent=5 // pred_check
        _
      $region10: #{conv1d_forward.1} parent=5 // pred_check_branch
        %98 = sbr.rel (%p95) target = $region12
      $region11: #{conv1d_forward.1} parent=5 // pred_region
        %s99 = ssub.s32 %s12, 1
        // Predicated region
        $region13: #{conv1d_forward.1} parent=11 // pred_check
          %p100 = pneg %p59
        $region14: #{conv1d_forward.1} parent=11 // pred_check_branch
          %102 = sbr.rel (%p100) target = $region16
        $region15: #{conv1d_forward.1} parent=11 // pred_region
          %104 = vsyncadd [#allocation6], 0
          %s105 = sshll.u32 %s1, 4
          %s106 = int_to_ptr.hbm [resolvable:$true] %s105
          %s107 = sshll.u32 [#allocation5], 4
          %s108 = int_to_ptr.vmem [resolvable:$true] %s107
          %113 = dma.hbm_to_vmem [thread:$0]  %s106, 512, %s108, [#allocation6], 128, 128, 8
        $region16: #{conv1d_forward.1} parent=11 // pred_fallthru
          _
      $region12: #{conv1d_forward.1} parent=5 // pred_fallthru
        _
      %p114 = scmp.lt.s32.totalorder %s12, 2
      // Predicated region
      $region17: #{conv1d_forward.1} parent=5 // pred_check
        %p115 = pneg %p114
      $region18: #{conv1d_forward.1} parent=5 // pred_check_branch
        %117 = sbr.rel (%p115) target = $region20
      $region19: #{conv1d_forward.1} parent=5 // pred_region
        // Predicated region
        $region21: #{conv1d_forward.1} parent=19 // pred_check
          %p118 = pneg %p32
        $region22: #{conv1d_forward.1} parent=19 // pred_check_branch
          %120 = sbr.rel (%p118) target = $region24
        $region23: #{conv1d_forward.1} parent=19 // pred_region
          %s121 = sand.u32 %s22, 1
          %s122 = scalar_lea.sflag [#allocation4], %s121
          %s123 = sand.u32 %s22, 1
          %s124 = smul.addr %s123, 4
          %s125 = scalar_lea.vmem [#allocation3], %s124
          %127 = vsyncadd %s122, 0
          %s128 = smul.addr %s12, 4
          %s129 = scalar_lea.hbm %s0, %s128
          %s131 = sshll.u32 %s129, 4
          %s132 = int_to_ptr.hbm [resolvable:$true] %s131
          %s133 = sshll.u32 %s125, 4
          %s134 = int_to_ptr.vmem [resolvable:$true] %s133
          %136 = dma.hbm_to_vmem [thread:$0]  %s132, 64, %s134, %s122
        $region24: #{conv1d_forward.1} parent=19 // pred_fallthru
          _
      $region20: #{conv1d_forward.1} parent=5 // pred_fallthru
        _
      %p137 = scmp.le.s32.totalorder 1, %s12
      %p138 = scmp.lt.s32.totalorder %s12, 3
      %p139 = pnand %p137, %p138
      %p140 = pneg %p139
      // Predicated region
      $region25: #{conv1d_forward.1} parent=5 // pred_check
        _
      $region26: #{conv1d_forward.1} parent=5 // pred_check_branch
        %142 = sbr.rel (%p139) target = $region28
      $region27: #{conv1d_forward.1} parent=5 // pred_region
        %s143 = ssub.s32 %s12, 1
        %s144 = sand.u32 %s25, 1
        %s145 = scalar_lea.sflag [#allocation4], %s144
        %s146 = sand.u32 %s25, 1
        %s147 = smul.addr %s146, 4
        %s148 = scalar_lea.vmem [#allocation3], %s147
        // Predicated region
        $region29: #{conv1d_forward.1} parent=27 // pred_check
          %p149 = pneg %p38
        $region30: #{conv1d_forward.1} parent=27 // pred_check_branch
          %151 = sbr.rel (%p149) target = $region32
        $region31: #{conv1d_forward.1} parent=27 // pred_region
          %153 = dma.done %s145, 64
        $region32: #{conv1d_forward.1} parent=27 // pred_fallthru
          _
        // Predicated region
        $region33: #{conv1d_forward.1} parent=27 // pred_check
          %p154 = pneg %p59
        $region34: #{conv1d_forward.1} parent=27 // pred_check_branch
          %156 = sbr.rel (%p154) target = $region36
        $region35: #{conv1d_forward.1} parent=27 // pred_region
          %158 = dma.done [#allocation6], 512
        $region36: #{conv1d_forward.1} parent=27 // pred_fallthru
          _
        %s159 = sand.u32 %s25, 1
        %s160 = scalar_lea.sflag [#allocation4], %s159
        %s161 = sand.u32 %s25, 1
        %s162 = smul.addr %s161, 4
        %s163 = scalar_lea.vmem [#allocation3], %s162
        %p164 = pneg %p38
        %p165 = pneg %p35
        %p166 = pneg %p59
        %p167 = pneg %p56
        %p168 = pneg %p85
        %p169 = pneg %p82
        %p170 = scmp.lt.s32.totalorder %s17, 1
        %s171 = scalar_select %p170, %s17, 1
        %s172 = smul.addr %s171, 4
        %s173 = smul.addr %s172, 8
        %s174 = scalar_lea.vmem %s2, %s173
        %p175 = scmp.lt.s32.totalorder %s17, 1
        %s176 = scalar_select %p175, %s17, 1
        %s177 = smul.addr %s176, 4
        %s178 = smul.addr %s177, 8
        %s179 = scalar_lea.vmem %s2, %s178
        %180 = vst [vmem:[#allocation2] sm:$0xff] 0.0
        %181 = vst [vmem:[#allocation2 + $0x8] sm:$0xff] 0.0
        %182 = vst [vmem:[#allocation2 + $0x10] sm:$0xff] 0.0
        %183 = vst [vmem:[#allocation2 + $0x18] sm:$0xff] 0.0
        %184 = vst [vmem:[#allocation2 + $0x20] sm:$0xff] 0.0
        %185 = vst [vmem:[#allocation2 + $0x28] sm:$0xff] 0.0
        %186 = vst [vmem:[#allocation2 + $0x30] sm:$0xff] 0.0
        %187 = vst [vmem:[#allocation2 + $0x38] sm:$0xff] 0.0
        %188 = vst [vmem:[#allocation2 + $0x40] sm:$0xff] 0.0
        %189 = vst [vmem:[#allocation2 + $0x48] sm:$0xff] 0.0
        %190 = vst [vmem:[#allocation2 + $0x50] sm:$0xff] 0.0
        %191 = vst [vmem:[#allocation2 + $0x58] sm:$0xff] 0.0
        %192 = vst [vmem:[#allocation2 + $0x60] sm:$0xff] 0.0
        %193 = vst [vmem:[#allocation2 + $0x68] sm:$0xff] 0.0
        %194 = vst [vmem:[#allocation2 + $0x70] sm:$0xff] 0.0
        %195 = vst [vmem:[#allocation2 + $0x78] sm:$0xff] 0.0
        %196 = vst [vmem:[#allocation2 + $0x78] sm:$0x1] 1.0
        %v197 = vld [vmem:[%s148] sm:$0xf]
        %vm198 = vcmask 281600
        %199 = vst.msk [vmem:[#allocation2] sm:$0xf] %vm198, %v197
        %v200 = vld [vmem:[%s148] sm:$0xf]
        %202 = vrot.lane.b32.xlu0 %v200, 127
        %v203 = vpop.permute.xlu0 %202
        %205 = vst.msk [vmem:[#allocation2 + $0x4] sm:$0xf] %vm198, %v203
        %v206 = vld [vmem:[%s148] sm:$0xf]
        %208 = vrot.lane.b32.xlu0 %v206, 126
        %v209 = vpop.permute.xlu0 %208
        %211 = vst.msk [vmem:[#allocation2 + $0x8] sm:$0xf] %vm198, %v209
        %v212 = vld [vmem:[%s148] sm:$0xf]
        %214 = vrot.lane.b32.xlu0 %v212, 125
        %v215 = vpop.permute.xlu0 %214
        %217 = vst.msk [vmem:[#allocation2 + $0xc] sm:$0xf] %vm198, %v215
        %v218 = vld [vmem:[%s148] sm:$0xf]
        %220 = vrot.lane.b32.xlu0 %v218, 124
        %v221 = vpop.permute.xlu0 %220
        %223 = vst.msk [vmem:[#allocation2 + $0x10] sm:$0xf] %vm198, %v221
        %v224 = vld [vmem:[%s148] sm:$0xf]
        %226 = vrot.lane.b32.xlu0 %v224, 123
        %v227 = vpop.permute.xlu0 %226
        %229 = vst.msk [vmem:[#allocation2 + $0x14] sm:$0xf] %vm198, %v227
        %v230 = vld [vmem:[%s148] sm:$0xf]
        %232 = vrot.lane.b32.xlu0 %v230, 122
        %v233 = vpop.permute.xlu0 %232
        %235 = vst.msk [vmem:[#allocation2 + $0x18] sm:$0xf] %vm198, %v233
        %v236 = vld [vmem:[%s148] sm:$0xf]
        %238 = vrot.lane.b32.xlu0 %v236, 121
        %v239 = vpop.permute.xlu0 %238
        %241 = vst.msk [vmem:[#allocation2 + $0x1c] sm:$0xf] %vm198, %v239
        %v242 = vld [vmem:[%s148] sm:$0xf]
        %244 = vrot.lane.b32.xlu0 %v242, 120
        %v245 = vpop.permute.xlu0 %244
        %247 = vst.msk [vmem:[#allocation2 + $0x20] sm:$0xf] %vm198, %v245
        %v248 = vld [vmem:[%s148] sm:$0xf]
        %250 = vrot.lane.b32.xlu0 %v248, 119
        %v251 = vpop.permute.xlu0 %250
        %253 = vst.msk [vmem:[#allocation2 + $0x24] sm:$0xf] %vm198, %v251
        %v254 = vld [vmem:[%s148] sm:$0xf]
        %256 = vrot.lane.b32.xlu0 %v254, 118
        %v257 = vpop.permute.xlu0 %256
        %259 = vst.msk [vmem:[#allocation2 + $0x28] sm:$0xf] %vm198, %v257
        %v260 = vld [vmem:[%s148] sm:$0xf]
        %262 = vrot.lane.b32.xlu0 %v260, 117
        %v263 = vpop.permute.xlu0 %262
        %265 = vst.msk [vmem:[#allocation2 + $0x2c] sm:$0xf] %vm198, %v263
        %v266 = vld [vmem:[%s148] sm:$0xf]
        %268 = vrot.lane.b32.xlu0 %v266, 116
        %v269 = vpop.permute.xlu0 %268
        %271 = vst.msk [vmem:[#allocation2 + $0x30] sm:$0xf] %vm198, %v269
        %v272 = vld [vmem:[%s148] sm:$0xf]
        %274 = vrot.lane.b32.xlu0 %v272, 115
        %v275 = vpop.permute.xlu0 %274
        %277 = vst.msk [vmem:[#allocation2 + $0x34] sm:$0xf] %vm198, %v275
        %v278 = vld [vmem:[%s148] sm:$0xf]
        %280 = vrot.lane.b32.xlu0 %v278, 114
        %v281 = vpop.permute.xlu0 %280
        %283 = vst.msk [vmem:[#allocation2 + $0x38] sm:$0xf] %vm198, %v281
        %v284 = vld [vmem:[%s148] sm:$0xf]
        %286 = vrot.lane.b32.xlu0 %v284, 113
        %v287 = vpop.permute.xlu0 %286
        %289 = vst.msk [vmem:[#allocation2 + $0x3c] sm:$0xf] %vm198, %v287
        %v290 = vld [vmem:[%s148] sm:$0xf]
        %292 = vrot.lane.b32.xlu0 %v290, 112
        %v293 = vpop.permute.xlu0 %292
        %295 = vst.msk [vmem:[#allocation2 + $0x40] sm:$0xf] %vm198, %v293
        %v296 = vld [vmem:[%s148] sm:$0xf]
        %298 = vrot.lane.b32.xlu0 %v296, 111
        %v299 = vpop.permute.xlu0 %298
        %301 = vst.msk [vmem:[#allocation2 + $0x44] sm:$0xf] %vm198, %v299
        %v302 = vld [vmem:[%s148] sm:$0xf]
        %304 = vrot.lane.b32.xlu0 %v302, 110
        %v305 = vpop.permute.xlu0 %304
        %307 = vst.msk [vmem:[#allocation2 + $0x48] sm:$0xf] %vm198, %v305
        %v308 = vld [vmem:[%s148] sm:$0xf]
        %310 = vrot.lane.b32.xlu0 %v308, 109
        %v311 = vpop.permute.xlu0 %310
        %313 = vst.msk [vmem:[#allocation2 + $0x4c] sm:$0xf] %vm198, %v311
        %v314 = vld [vmem:[%s148] sm:$0xf]
        %316 = vrot.lane.b32.xlu0 %v314, 108
        %v317 = vpop.permute.xlu0 %316
        %319 = vst.msk [vmem:[#allocation2 + $0x50] sm:$0xf] %vm198, %v317
        %v320 = vld [vmem:[%s148] sm:$0xf]
        %322 = vrot.lane.b32.xlu0 %v320, 107
        %v323 = vpop.permute.xlu0 %322
        %325 = vst.msk [vmem:[#allocation2 + $0x54] sm:$0xf] %vm198, %v323
        %v326 = vld [vmem:[%s148] sm:$0xf]
        %328 = vrot.lane.b32.xlu0 %v326, 106
        %v329 = vpop.permute.xlu0 %328
        %331 = vst.msk [vmem:[#allocation2 + $0x58] sm:$0xf] %vm198, %v329
        %v332 = vld [vmem:[%s148] sm:$0xf]
        %334 = vrot.lane.b32.xlu0 %v332, 105
        %v335 = vpop.permute.xlu0 %334
        %337 = vst.msk [vmem:[#allocation2 + $0x5c] sm:$0xf] %vm198, %v335
        %v338 = vld [vmem:[%s148] sm:$0xf]
        %340 = vrot.lane.b32.xlu0 %v338, 104
        %v341 = vpop.permute.xlu0 %340
        %343 = vst.msk [vmem:[#allocation2 + $0x60] sm:$0xf] %vm198, %v341
        %v344 = vld [vmem:[%s148] sm:$0xf]
        %346 = vrot.lane.b32.xlu0 %v344, 103
        %v347 = vpop.permute.xlu0 %346
        %349 = vst.msk [vmem:[#allocation2 + $0x64] sm:$0xf] %vm198, %v347
        %v350 = vld [vmem:[%s148] sm:$0xf]
        %352 = vrot.lane.b32.xlu0 %v350, 102
        %v353 = vpop.permute.xlu0 %352
        %355 = vst.msk [vmem:[#allocation2 + $0x68] sm:$0xf] %vm198, %v353
        %v356 = vld [vmem:[%s148] sm:$0xf]
        %358 = vrot.lane.b32.xlu0 %v356, 101
        %v359 = vpop.permute.xlu0 %358
        %361 = vst.msk [vmem:[#allocation2 + $0x6c] sm:$0xf] %vm198, %v359
        %v362 = vld [vmem:[%s148] sm:$0xf]
        %364 = vrot.lane.b32.xlu0 %v362, 100
        %v365 = vpop.permute.xlu0 %364
        %367 = vst.msk [vmem:[#allocation2 + $0x70] sm:$0xf] %vm198, %v365
        %v368 = vld [vmem:[%s148] sm:$0xf]
        %370 = vrot.lane.b32.xlu0 %v368, 99
        %v371 = vpop.permute.xlu0 %370
        %373 = vst.msk [vmem:[#allocation2 + $0x74] sm:$0xf] %vm198, %v371
        %v374 = vld [vmem:[#allocation5] sm:$0xff]
        %v375 = vld [vmem:[#allocation5 + $0x8] sm:$0xff]
        %v376 = vld [vmem:[#allocation5 + $0x10] sm:$0xff]
        %v377 = vld [vmem:[#allocation5 + $0x18] sm:$0xff]
        %v378 = vld [vmem:[#allocation2] sm:$0xff]
        %v379 = vld [vmem:[#allocation2 + $0x8] sm:$0xff]
        %v380 = vld [vmem:[#allocation2 + $0x10] sm:$0xff]
        %v381 = vld [vmem:[#allocation2 + $0x18] sm:$0xff]
        %v382 = vld [vmem:[#allocation2 + $0x20] sm:$0xff]
        %v383 = vld [vmem:[#allocation2 + $0x28] sm:$0xff]
        %v384 = vld [vmem:[#allocation2 + $0x30] sm:$0xff]
        %v385 = vld [vmem:[#allocation2 + $0x38] sm:$0xff]
        %v386 = vld [vmem:[#allocation2 + $0x40] sm:$0xff]
        %v387 = vld [vmem:[#allocation2 + $0x48] sm:$0xff]
        %v388 = vld [vmem:[#allocation2 + $0x50] sm:$0xff]
        %v389 = vld [vmem:[#allocation2 + $0x58] sm:$0xff]
        %v390 = vld [vmem:[#allocation2 + $0x60] sm:$0xff]
        %v391 = vld [vmem:[#allocation2 + $0x68] sm:$0xff]
        %v392 = vld [vmem:[#allocation2 + $0x70] sm:$0xff]
        %v393 = vld [vmem:[#allocation2 + $0x78] sm:$0xff]
        %394 = vmatpush.msra.mxu0 %v393
        %395 = vmatpush.msra.mxu0 %v392
        %396 = vmatpush.msra.mxu0 %v391
        %397 = vmatpush.msra.mxu0 %v390
        %398 = vmatpush.msra.mxu0 %v389
        %399 = vmatpush.msra.mxu0 %v388
        %400 = vmatpush.msra.mxu0 %v387
        %401 = vmatpush.msra.mxu0 %v386
        %402 = vmatpush.msra.mxu0 %v385
        %403 = vmatpush.msra.mxu0 %v384
        %404 = vmatpush.msra.mxu0 %v383
        %405 = vmatpush.msra.mxu0 %v382
        %406 = vmatpush.msra.mxu0 %v381
        %407 = vmatpush.msra.mxu0 %v380
        %408 = vmatpush.msra.mxu0 %v379
        %409 = vmatpush.msra.mxu0 %v378
        %410 = vmatmul.f32.gmra.mxu0 %v374
        %v411 = vpop.f32.mrf.mxu0
        %v412 = vadd.f32 0.0, %v411
        %413 = vmatmul.f32.gmra.mxu0 %v375
        %v414 = vpop.f32.mrf.mxu0
        %v415 = vadd.f32 0.0, %v414
        %416 = vmatmul.f32.gmra.mxu0 %v376
        %v417 = vpop.f32.mrf.mxu0
        %v418 = vadd.f32 0.0, %v417
        %419 = vmatmul.f32.gmra.mxu0 %v377
        %v420 = vpop.f32.mrf.mxu0
        %v421 = vadd.f32 0.0, %v420
        %422 = vdwg.mxu0
        %423 = vst [vmem:[%s179] sm:$0xff] %v412
        %424 = vst [vmem:[%s179 + $0x8] sm:$0xff] %v415
        %425 = vst [vmem:[%s179 + $0x10] sm:$0xff] %v418
        %426 = vst [vmem:[%s179 + $0x18] sm:$0xff] %v421
        %p427 = scmp.lt.s32.totalorder %s17, 1
        %s428 = scalar_select %p427, %s17, 1
        %s429 = smul.addr %s428, 4
        %s430 = smul.addr %s429, 8
        %s431 = scalar_lea.vmem %s2, %s430
        // Predicated region
        $region37: #{conv1d_forward.1} parent=27 // pred_check
          %p432 = pneg %p82
        $region38: #{conv1d_forward.1} parent=27 // pred_check_branch
          %434 = sbr.rel (%p432) target = $region40
        $region39: #{conv1d_forward.1} parent=27 // pred_region
          _
        $region40: #{conv1d_forward.1} parent=27 // pred_fallthru
          _
      $region28: #{conv1d_forward.1} parent=5 // pred_fallthru
        _
      %p435 = scmp.le.s32.totalorder 2, %s12
      // Predicated region
      $region41: #{conv1d_forward.1} parent=5 // pred_check
        %p436 = pneg %p435
      $region42: #{conv1d_forward.1} parent=5 // pred_check_branch
        %438 = sbr.rel (%p436) target = $region44
      $region43: #{conv1d_forward.1} parent=5 // pred_region
        %s439 = ssub.s32 %s12, 2
        // Predicated region
        $region45: #{conv1d_forward.1} parent=43 // pred_check
          %p440 = pneg %p88
        $region46: #{conv1d_forward.1} parent=43 // pred_check_branch
          %442 = sbr.rel (%p440) target = $region48
        $region47: #{conv1d_forward.1} parent=43 // pred_region
          %p443 = scmp.lt.s32.totalorder %s18, 1
          %s444 = scalar_select %p443, %s18, 1
          %s445 = smul.addr %s444, 4
          %s446 = smul.addr %s445, 8
          %s447 = scalar_lea.vmem %s2, %s446
        $region48: #{conv1d_forward.1} parent=43 // pred_fallthru
          _
      $region44: #{conv1d_forward.1} parent=5 // pred_fallthru
        _
    $region6: #{conv1d_forward.1} parent=1 // loop_footer
      %s16 = sadd.s32 1, %s12
    $region7: #{conv1d_forward.1} parent=1 // loop_footer_branch
      %11 = sbr.rel target = $region3
    $region8: #{conv1d_forward.1} parent=1 // loop_exit
      _
    %448 = vsyncpa [#allocation4], 1
    %s449 = scalar_lea.sflag [#allocation4], 1
    %450 = vsyncpa %s449, 1
    %451 = vsyncpa [#allocation6], 1

</llo_original>
